<compile_context>
chip_gen: v5e
topology: v5e:2x2
jax: 0.10.0
libtpu: 0.0.40
codegen_flags: <defaults>
</compile_context>

<pallas_src>
import jax
import jax.numpy as jnp
import numpy as np
from jax.experimental import pallas as pl
from jax.experimental.pallas import tpu as pltpu


def _feature_map_kernel(ids_ref, wt_ref, out_ref):
    # ids_ref: (1, TILE_N) int32   -- dense lane-major row ids
    # wt_ref:  (E, V)      f32     -- transposed multi-hot table (grid-invariant)
    # out_ref: (E, TILE_N) f32     -- transposed output block
    ids = ids_ref[...]                       # (1, TILE_N)
    wt = wt_ref[...]                         # (E, V); hoisted single read
    E, V = wt.shape

    # Initialise to -100: lanes whose id matches no table row (id == -100 or
    # wrapper padding) come out as -100 across all E sublanes == the module's
    # ignore-override semantics.
    acc = jnp.full(out_ref.shape, -100.0, dtype=jnp.float32)

    # Unrolled VPU select chain over the (small) vocab.  Each step: one
    # (1, TILE_N) compare (sublane-broadcast into the select) and one
    # (E, TILE_N) select with the table column lane-broadcast.
    for v in range(V):
        col = wt[:, v:v + 1]                 # (E, 1), static lane slice
        acc = jnp.where(ids == v, col, acc)  # -> (E, TILE_N)

    out_ref[...] = acc


def feature_map_forward(ids, weight, tile_n=8192):
    """ids: int array of token ids (-100 = ignore), any shape.
    weight: (V, E) multi-hot table.  Returns ids.shape + (E,) float32."""
    orig_shape = ids.shape
    V, E = weight.shape

    ids_flat = jnp.asarray(ids).reshape(-1).astype(jnp.int32)
    n = ids_flat.shape[0]
    if n == 0:  # guard: empty input
        return jnp.zeros((*orig_shape, E), dtype=jnp.float32)

    # Lane tile: multiple of 128, clamped to the (rounded-up) problem size.
    tile = max(128, min(int(tile_n), ((n + 127) // 128) * 128))
    tile = ((tile + 127) // 128) * 128
    n_pad = ((n + tile - 1) // tile) * tile

    ids_flat = jnp.pad(ids_flat, (0, n_pad - n), constant_values=-100)
    ids2 = ids_flat.reshape(1, n_pad)                    # dense lane-major ids
    w_t = jnp.transpose(weight.astype(jnp.float32))      # (E, V)

    cost = pl.CostEstimate(
        flops=0,
        transcendentals=0,
        bytes_accessed=n_pad * 4 + E * V * 4 + n_pad * E * 4,
    )

    out_t = pl.pallas_call(
        _feature_map_kernel,
        out_shape=jax.ShapeDtypeStruct((E, n_pad), jnp.float32),
        grid_spec=pltpu.PrefetchScalarGridSpec(
            num_scalar_prefetch=0,
            grid=(n_pad // tile,),
            in_specs=[
                pl.BlockSpec((1, tile), lambda i: (0, i)),
                # Grid-invariant 480 B table; double-buffer cost is negligible
                # at this size so the plain constant-index BlockSpec is kept.
                pl.BlockSpec((E, V), lambda i: (0, 0)),
            ],
            out_specs=pl.BlockSpec((E, tile), lambda i: (0, i)),
        ),
        compiler_params=pltpu.CompilerParams(
            dimension_semantics=("parallel",)),
        cost_estimate=cost,
    )(ids2, w_t)

    out = jnp.transpose(out_t)[:n]                       # (n, E)
    return out.reshape(*orig_shape, E)


def build_feature_map_weight(feature_map_vals):
    """feature_map_vals: (V, F) ints in {0,1,2} -> multi-hot weight (V, 3F)."""
    V, F = feature_map_vals.shape
    return jax.nn.one_hot(feature_map_vals, 3, dtype=jnp.float32).reshape(V, 3 * F)


if __name__ == "__main__":
    # Deterministic synthetic "feature_map" (the module's __init__ argument).
    V = 8            # number of rows in feature_map (embedding vocab)
    F = 5            # features per row -> E = 15
    B, S = 2, 16     # batch, sequence length

    key = jax.random.PRNGKey(0)
    k_fm, k_ids, k_mask = jax.random.split(key, 3)

    feature_map_vals = jax.random.randint(k_fm, (V, F), 0, 3, dtype=jnp.int32)
    weight = build_feature_map_weight(feature_map_vals)        # (V, 3F) f32

    ids = jax.random.randint(k_ids, (B, S), 0, V, dtype=jnp.int32)
    ignore_mask = jax.random.bernoulli(k_mask, 0.25, (B, S))
    ids = jnp.where(ignore_mask, jnp.int32(-100), ids)

    out = feature_map_forward(ids, weight)
    out = jax.block_until_ready(out)

    # Pure-JAX reference for correctness.
    safe = jnp.where(ids == -100, 0, ids)
    ref = weight[safe]
    ref = jnp.where((ids == -100)[..., None], -100.0, ref)
    assert out.shape == (B, S, 3 * F) and out.dtype == jnp.float32
    np.testing.assert_allclose(np.asarray(out), np.asarray(ref), atol=0, rtol=0)

    print("KERNEL_OK")
</pallas_src>

<mosaic_0001>
module attributes {stable_mosaic.version = 11 : i64} {
  func.func @_feature_map_kernel(%arg0: i32, %arg1: memref<1x128xi32, #tpu.memory_space<vmem>>, %arg2: memref<15x8xf32, #tpu.memory_space<vmem>>, %arg3: memref<15x128xf32, #tpu.memory_space<vmem>>) attributes {dimension_semantics = [#tpu.dimension_semantics<parallel>], iteration_bounds = array<i64: 1>, scalar_prefetch = 0 : i64, scratch_operands = 0 : i64, tpu.core_type = #tpu.core_type<tc>, window_params = [{transform_indices = @transform_0, window_bounds = array<i64: 1, 128>}, {pipeline_mode = #tpu.pipeline_mode<synchronous>, transform_indices = @transform_1, window_bounds = array<i64: 15, 8>}, {transform_indices = @transform_2, window_bounds = array<i64: 15, 128>}]} {
    %c0 = arith.constant 0 : index
    %c0_0 = arith.constant 0 : index
    %0 = vector.load %arg1[%c0, %c0_0] : memref<1x128xi32, #tpu.memory_space<vmem>>, vector<1x128xi32>
    %c0_1 = arith.constant 0 : index
    %c0_2 = arith.constant 0 : index
    %1 = vector.load %arg2[%c0_1, %c0_2] : memref<15x8xf32, #tpu.memory_space<vmem>>, vector<15x8xf32>
    %cst = arith.constant -1.000000e+02 : f32
    %2 = vector.broadcast %cst : f32 to vector<15x128xf32>
    %3 = vector.extract_strided_slice %1 {offsets = [0, 0], sizes = [15, 1], strides = [1, 1]} : vector<15x8xf32> to vector<15x1xf32>
    %c0_i32 = arith.constant 0 : i32
    %4 = vector.broadcast %c0_i32 : i32 to vector<1x128xi32>
    %5 = arith.cmpi eq, %0, %4 : vector<1x128xi32>
    %6 = vector.shape_cast %5 : vector<1x128xi1> to vector<1x128xi1>
    %7 = vector.broadcast %6 : vector<1x128xi1> to vector<15x128xi1>
    %8 = vector.shape_cast %3 : vector<15x1xf32> to vector<15x1xf32>
    %9 = vector.broadcast %8 : vector<15x1xf32> to vector<15x128xf32>
    %10 = arith.select %7, %9, %2 : vector<15x128xi1>, vector<15x128xf32>
    %11 = vector.extract_strided_slice %1 {offsets = [0, 1], sizes = [15, 1], strides = [1, 1]} : vector<15x8xf32> to vector<15x1xf32>
    %c1_i32 = arith.constant 1 : i32
    %12 = vector.broadcast %c1_i32 : i32 to vector<1x128xi32>
    %13 = arith.cmpi eq, %0, %12 : vector<1x128xi32>
    %14 = vector.shape_cast %13 : vector<1x128xi1> to vector<1x128xi1>
    %15 = vector.broadcast %14 : vector<1x128xi1> to vector<15x128xi1>
    %16 = vector.shape_cast %11 : vector<15x1xf32> to vector<15x1xf32>
    %17 = vector.broadcast %16 : vector<15x1xf32> to vector<15x128xf32>
    %18 = arith.select %15, %17, %10 : vector<15x128xi1>, vector<15x128xf32>
    %19 = vector.extract_strided_slice %1 {offsets = [0, 2], sizes = [15, 1], strides = [1, 1]} : vector<15x8xf32> to vector<15x1xf32>
    %c2_i32 = arith.constant 2 : i32
    %20 = vector.broadcast %c2_i32 : i32 to vector<1x128xi32>
    %21 = arith.cmpi eq, %0, %20 : vector<1x128xi32>
    %22 = vector.shape_cast %21 : vector<1x128xi1> to vector<1x128xi1>
    %23 = vector.broadcast %22 : vector<1x128xi1> to vector<15x128xi1>
    %24 = vector.shape_cast %19 : vector<15x1xf32> to vector<15x1xf32>
    %25 = vector.broadcast %24 : vector<15x1xf32> to vector<15x128xf32>
    %26 = arith.select %23, %25, %18 : vector<15x128xi1>, vector<15x128xf32>
    %27 = vector.extract_strided_slice %1 {offsets = [0, 3], sizes = [15, 1], strides = [1, 1]} : vector<15x8xf32> to vector<15x1xf32>
    %c3_i32 = arith.constant 3 : i32
    %28 = vector.broadcast %c3_i32 : i32 to vector<1x128xi32>
    %29 = arith.cmpi eq, %0, %28 : vector<1x128xi32>
    %30 = vector.shape_cast %29 : vector<1x128xi1> to vector<1x128xi1>
    %31 = vector.broadcast %30 : vector<1x128xi1> to vector<15x128xi1>
    %32 = vector.shape_cast %27 : vector<15x1xf32> to vector<15x1xf32>
    %33 = vector.broadcast %32 : vector<15x1xf32> to vector<15x128xf32>
    %34 = arith.select %31, %33, %26 : vector<15x128xi1>, vector<15x128xf32>
    %35 = vector.extract_strided_slice %1 {offsets = [0, 4], sizes = [15, 1], strides = [1, 1]} : vector<15x8xf32> to vector<15x1xf32>
    %c4_i32 = arith.constant 4 : i32
    %36 = vector.broadcast %c4_i32 : i32 to vector<1x128xi32>
    %37 = arith.cmpi eq, %0, %36 : vector<1x128xi32>
    %38 = vector.shape_cast %37 : vector<1x128xi1> to vector<1x128xi1>
    %39 = vector.broadcast %38 : vector<1x128xi1> to vector<15x128xi1>
    %40 = vector.shape_cast %35 : vector<15x1xf32> to vector<15x1xf32>
    %41 = vector.broadcast %40 : vector<15x1xf32> to vector<15x128xf32>
    %42 = arith.select %39, %41, %34 : vector<15x128xi1>, vector<15x128xf32>
    %43 = vector.extract_strided_slice %1 {offsets = [0, 5], sizes = [15, 1], strides = [1, 1]} : vector<15x8xf32> to vector<15x1xf32>
    %c5_i32 = arith.constant 5 : i32
    %44 = vector.broadcast %c5_i32 : i32 to vector<1x128xi32>
    %45 = arith.cmpi eq, %0, %44 : vector<1x128xi32>
    %46 = vector.shape_cast %45 : vector<1x128xi1> to vector<1x128xi1>
    %47 = vector.broadcast %46 : vector<1x128xi1> to vector<15x128xi1>
    %48 = vector.shape_cast %43 : vector<15x1xf32> to vector<15x1xf32>
    %49 = vector.broadcast %48 : vector<15x1xf32> to vector<15x128xf32>
    %50 = arith.select %47, %49, %42 : vector<15x128xi1>, vector<15x128xf32>
    %51 = vector.extract_strided_slice %1 {offsets = [0, 6], sizes = [15, 1], strides = [1, 1]} : vector<15x8xf32> to vector<15x1xf32>
    %c6_i32 = arith.constant 6 : i32
    %52 = vector.broadcast %c6_i32 : i32 to vector<1x128xi32>
    %53 = arith.cmpi eq, %0, %52 : vector<1x128xi32>
    %54 = vector.shape_cast %53 : vector<1x128xi1> to vector<1x128xi1>
    %55 = vector.broadcast %54 : vector<1x128xi1> to vector<15x128xi1>
    %56 = vector.shape_cast %51 : vector<15x1xf32> to vector<15x1xf32>
    %57 = vector.broadcast %56 : vector<15x1xf32> to vector<15x128xf32>
    %58 = arith.select %55, %57, %50 : vector<15x128xi1>, vector<15x128xf32>
    %59 = vector.extract_strided_slice %1 {offsets = [0, 7], sizes = [15, 1], strides = [1, 1]} : vector<15x8xf32> to vector<15x1xf32>
    %c7_i32 = arith.constant 7 : i32
    %60 = vector.broadcast %c7_i32 : i32 to vector<1x128xi32>
    %61 = arith.cmpi eq, %0, %60 : vector<1x128xi32>
    %62 = vector.shape_cast %61 : vector<1x128xi1> to vector<1x128xi1>
    %63 = vector.broadcast %62 : vector<1x128xi1> to vector<15x128xi1>
    %64 = vector.shape_cast %59 : vector<15x1xf32> to vector<15x1xf32>
    %65 = vector.broadcast %64 : vector<15x1xf32> to vector<15x128xf32>
    %66 = arith.select %63, %65, %58 : vector<15x128xi1>, vector<15x128xf32>
    %c0_3 = arith.constant 0 : index
    %c0_4 = arith.constant 0 : index
    %67 = vector.load %arg3[%c0_3, %c0_4] : memref<15x128xf32, #tpu.memory_space<vmem>>, vector<15x128xf32>
    tpu.vector_store %arg3[%c0_3, %c0_4], %66 {strides = array<i32>} : memref<15x128xf32, #tpu.memory_space<vmem>>, vector<15x128xf32>,
    return
  }
  func.func @transform_0(%arg0: i32) -> (i32, i32) {
    %c0_i32 = arith.constant 0 : i32
    %c0_i32_0 = arith.constant 0 : i32
    return %c0_i32, %arg0 : i32, i32
  }
  func.func @transform_1(%arg0: i32) -> (i32, i32) {
    %c0_i32 = arith.constant 0 : i32
    %c0_i32_0 = arith.constant 0 : i32
    %c0_i32_1 = arith.constant 0 : i32
    return %c0_i32, %c0_i32_0 : i32, i32
  }
  func.func @transform_2(%arg0: i32) -> (i32, i32) {
    %c0_i32 = arith.constant 0 : i32
    %c0_i32_0 = arith.constant 0 : i32
    return %c0_i32, %arg0 : i32, i32
  }
}

</mosaic_0001>

<llo_original>
// kernel: tpu_custom_call.1
$region0: #{tpu_custom_call.1}
  #allocation0 [shape = 'u32[]', space=smem, size = 0x4, offset = 0x4, fixed_abs, tag = 'smem constant byte address 0x4 - core index']
  #allocation1 [shape = 'u32[72,128]{1,0:T(1,128)}', space=vmem, size = 0x9000, scoped, tag = 'internal scratch']
  %s0 = inlined_call_operand.vmem [shape: s32[1,128], index: 0, kind: input, shape index: {}]
  %s1 = inlined_call_operand.vmem [shape: f32[15,8], index: 1, kind: input, shape index: {}]
  %s2 = inlined_call_operand.hbm [shape: f32[15,128], index: 2, kind: output, shape index: {}]
  %s3 = sld [smem:[#allocation0]]
  $region18: #{tpu_custom_call.1} parent=0
    _
  %s5 = ssub.s32 1, %s3
  %s6 = scalar_select 0, %s5, %s3
  $region1: #{tpu_custom_call.1} parent=0
    #allocation2 [shape = 'u8[8192]{0}', space=vmem, size = 0x2000, scoped, tag = 'output window, operand 0, single buffered']
    #allocation3 [shape = 's32[1]{0}', space=sflag, size = 0x4, scoped, tag = 'scoped memory for tpu_custom_call.1']
    %7 = vsyncpa [#allocation3], 0
    // Predicated region
    $region2: #{tpu_custom_call.1} parent=1 // pred_check
      _
    $region3: #{tpu_custom_call.1} parent=1 // pred_check_branch
      %9 = sbr.rel (0) target = $region5
    $region4: #{tpu_custom_call.1} parent=1 // pred_region
      _
    $region5: #{tpu_custom_call.1} parent=1 // pred_fallthru
      _
    // Predicated region
    $region6: #{tpu_custom_call.1} parent=1 // pred_check
      _
    $region7: #{tpu_custom_call.1} parent=1 // pred_check_branch
      %11 = sbr.rel (0) target = $region9
    $region8: #{tpu_custom_call.1} parent=1 // pred_region
      _
    $region9: #{tpu_custom_call.1} parent=1 // pred_fallthru
      _
    %v12 = vld [vmem:[%s0] sm:$0x1]
    %v13 = vld [vmem:[%s1] sm:$0xff]
    %v14 = vld [vmem:[%s1 + $0x8] sm:$0x7f]
    %vm15 = vcmp.eq.s32.totalorder %v12, 0
    %v16 = vsel %vm15, 1, 0
    %v17 = vperm.slane %v16, 0
    %vm18 = vcmp.eq.s32.totalorder %v17, 1
    %20 = vset.pattern.permute.xlu0 0
    %21 = vperm.xlu0 %20, %v13
    %v22 = vpop.permute.xlu0 %21
    %25 = vset.pattern.permute.xlu0 0
    %26 = vperm.xlu0 %25, %v14
    %v27 = vpop.permute.xlu0 %26
    %v29 = vsel %vm18, %v22, -100.0
    %v30 = vsel %vm18, %v27, -100.0
    %vm31 = vcmp.eq.s32.totalorder %v12, 1
    %v32 = vsel %vm31, 1, 0
    %v33 = vperm.slane %v32, 0
    %vm34 = vcmp.eq.s32.totalorder %v33, 1
    %35 = vset.pattern.permute.xlu0 1
    %36 = vperm.xlu0 %35, %v13
    %v37 = vpop.permute.xlu0 %36
    %39 = vset.pattern.permute.xlu0 1
    %40 = vperm.xlu0 %39, %v14
    %v41 = vpop.permute.xlu0 %40
    %v43 = vsel %vm34, %v37, %v29
    %v44 = vsel %vm34, %v41, %v30
    %vm45 = vcmp.eq.s32.totalorder %v12, 2
    %v46 = vsel %vm45, 1, 0
    %v47 = vperm.slane %v46, 0
    %vm48 = vcmp.eq.s32.totalorder %v47, 1
    %49 = vset.pattern.permute.xlu0 2
    %50 = vperm.xlu0 %49, %v13
    %v51 = vpop.permute.xlu0 %50
    %53 = vset.pattern.permute.xlu0 2
    %54 = vperm.xlu0 %53, %v14
    %v55 = vpop.permute.xlu0 %54
    %v57 = vsel %vm48, %v51, %v43
    %v58 = vsel %vm48, %v55, %v44
    %vm59 = vcmp.eq.s32.totalorder %v12, 3
    %v60 = vsel %vm59, 1, 0
    %v61 = vperm.slane %v60, 0
    %vm62 = vcmp.eq.s32.totalorder %v61, 1
    %63 = vset.pattern.permute.xlu0 3
    %64 = vperm.xlu0 %63, %v13
    %v65 = vpop.permute.xlu0 %64
    %67 = vset.pattern.permute.xlu0 3
    %68 = vperm.xlu0 %67, %v14
    %v69 = vpop.permute.xlu0 %68
    %v71 = vsel %vm62, %v65, %v57
    %v72 = vsel %vm62, %v69, %v58
    %vm73 = vcmp.eq.s32.totalorder %v12, 4
    %v74 = vsel %vm73, 1, 0
    %v75 = vperm.slane %v74, 0
    %vm76 = vcmp.eq.s32.totalorder %v75, 1
    %77 = vset.pattern.permute.xlu0 4
    %78 = vperm.xlu0 %77, %v13
    %v79 = vpop.permute.xlu0 %78
    %81 = vset.pattern.permute.xlu0 4
    %82 = vperm.xlu0 %81, %v14
    %v83 = vpop.permute.xlu0 %82
    %v85 = vsel %vm76, %v79, %v71
    %v86 = vsel %vm76, %v83, %v72
    %vm87 = vcmp.eq.s32.totalorder %v12, 5
    %v88 = vsel %vm87, 1, 0
    %v89 = vperm.slane %v88, 0
    %vm90 = vcmp.eq.s32.totalorder %v89, 1
    %91 = vset.pattern.permute.xlu0 5
    %92 = vperm.xlu0 %91, %v13
    %v93 = vpop.permute.xlu0 %92
    %95 = vset.pattern.permute.xlu0 5
    %96 = vperm.xlu0 %95, %v14
    %v97 = vpop.permute.xlu0 %96
    %v99 = vsel %vm90, %v93, %v85
    %v100 = vsel %vm90, %v97, %v86
    %vm101 = vcmp.eq.s32.totalorder %v12, 6
    %v102 = vsel %vm101, 1, 0
    %v103 = vperm.slane %v102, 0
    %vm104 = vcmp.eq.s32.totalorder %v103, 1
    %105 = vset.pattern.permute.xlu0 6
    %106 = vperm.xlu0 %105, %v13
    %v107 = vpop.permute.xlu0 %106
    %109 = vset.pattern.permute.xlu0 6
    %110 = vperm.xlu0 %109, %v14
    %v111 = vpop.permute.xlu0 %110
    %v113 = vsel %vm104, %v107, %v99
    %v114 = vsel %vm104, %v111, %v100
    %vm115 = vcmp.eq.s32.totalorder %v12, 7
    %v116 = vsel %vm115, 1, 0
    %v117 = vperm.slane %v116, 0
    %vm118 = vcmp.eq.s32.totalorder %v117, 1
    %119 = vset.pattern.permute.xlu0 7
    %120 = vperm.xlu0 %119, %v13
    %v121 = vpop.permute.xlu0 %120
    %123 = vset.pattern.permute.xlu0 7
    %124 = vperm.xlu0 %123, %v14
    %v125 = vpop.permute.xlu0 %124
    %v127 = vsel %vm118, %v121, %v113
    %v128 = vsel %vm118, %v125, %v114
    %129 = vst [vmem:[#allocation2] sm:$0xff] %v127
    %130 = vst [vmem:[#allocation2 + $0x8] sm:$0x7f] %v128
    // Predicated region
    $region10: #{tpu_custom_call.1} parent=1 // pred_check
      _
    $region11: #{tpu_custom_call.1} parent=1 // pred_check_branch
      %132 = sbr.rel (0) target = $region13
    $region12: #{tpu_custom_call.1} parent=1 // pred_region
      %134 = vsyncadd [#allocation3], 0
      %s135 = sshll.u32 [#allocation2], 4
      %s136 = int_to_ptr.vmem [resolvable:$true] %s135
      %s137 = sshll.u32 %s2, 4
      %s138 = int_to_ptr.hbm [resolvable:$true] %s137
      %143 = dma.vmem_to_hbm [thread:$0]  %s136, 256, %s138, [#allocation3], 128, 128, 8
    $region13: #{tpu_custom_call.1} parent=1 // pred_fallthru
      _
    // Predicated region
    $region14: #{tpu_custom_call.1} parent=1 // pred_check
      _
    $region15: #{tpu_custom_call.1} parent=1 // pred_check_branch
      %145 = sbr.rel (0) target = $region17
    $region16: #{tpu_custom_call.1} parent=1 // pred_region
      %147 = dma.done [#allocation3], 256
    $region17: #{tpu_custom_call.1} parent=1 // pred_fallthru
      _
    %148 = vsyncpa [#allocation3], 1

</llo_original>
